<compile_context>
chip_gen: v7x
topology: tpu7x:2x2x1
jax: 0.10.0
libtpu: 0.0.40
codegen_flags: <defaults>
</compile_context>

<pallas_src>
from functools import partial

import jax
import jax.numpy as jnp
from jax import lax
from jax.experimental import pallas as pl
from jax.experimental.pallas import tpu as pltpu


def _round_up(a, b):
    return (a + b - 1) // b * b


def _vmem_budget_bytes():
    """Per-core VMEM budget: 3/4 of physical, capped at 100 MiB (v7x has only
    64 MiB per TensorCore -> 48 MiB; v5e/v6e -> 96 MiB). Falls back to the
    smallest (v7x) assumption if the query is unavailable."""
    phys = None
    try:
        info = pltpu.get_tpu_info()
        phys = getattr(info, "vmem_capacity_bytes", None)
    except Exception:
        phys = None
    if not phys:
        phys = 64 * 1024 * 1024
    return int(min(phys * 3 // 4, 100 * 1024 * 1024))


# Packed small-parameter row layout (per depth slice, f32, (16, Wp)):
#   row 0: gamma (D)    row 1: beta (D)   row 2: b1 (2H)
#   row 3: bc1 (H/2)    row 4: bc2 (H)    row 5: b2 (D)
#   rows 6..6+C-1: wc1[k, :] (H/2 each)   (C = ctx dim = 5)
def _block_compute(x, ctx, sp, w1, wc2, w2, *, d, h, hc, c):
    gamma = sp[0, :d]
    beta = sp[1, :d]
    b1 = sp[2, :2 * h]
    bc1 = sp[3, :hc]
    bc2 = sp[4, :h]
    b2 = sp[5, :d]

    # LayerNorm over the feature axis (eps = 1e-5, PyTorch default), f32.
    mean = jnp.mean(x, axis=-1, keepdims=True)
    var = jnp.mean(jnp.square(x - mean), axis=-1, keepdims=True)
    xn = (x - mean) * lax.rsqrt(var + 1e-5) * gamma + beta

    # channel_proj1 as ONE MXU matmul (bf16 operands, f32 accumulate), then split.
    y = jnp.dot(xn.astype(w1.dtype), w1, preferred_element_type=jnp.float32) + b1
    u = y[:, :h]
    v = y[:, h:]

    # Hardswish trunk (VPU): u * relu6(u + 3) / 6.
    u = u * jnp.clip(u + 3.0, 0.0, 6.0) * (1.0 / 6.0)

    # ctx MLP.  K=5 contraction stays on the VPU (5 broadcast FMAs); only the
    # (H/2 -> H) projection touches the MXU.  GELU uses the tanh approx (EUP).
    hm = bc1
    for k in range(c):
        hm = hm + ctx[:, k:k + 1] * sp[6 + k, :hc]
    hm = jax.nn.gelu(hm, approximate=True)
    cpr = jnp.dot(hm.astype(wc2.dtype), wc2, preferred_element_type=jnp.float32) + bc2

    v = jax.nn.sigmoid(v + cpr)

    # channel_proj2 + residual (f32).
    out = jnp.dot((u * v).astype(w2.dtype), w2, preferred_element_type=jnp.float32) + b2
    return out + x


def _resident_kernel(x_ref, ctx_ref, sp_ref, w1_ref, wc2_ref, w2_ref, o_ref,
                     *, depth, d, h, hc, c):
    """Grid = (row_tiles,). All depth-stacked weights are VMEM-resident; the
    depth loop runs inside the kernel with the activation as the loop carry."""
    x = x_ref[...].astype(jnp.float32)
    ctx = ctx_ref[...].astype(jnp.float32)

    def body(l, xl):
        return _block_compute(xl, ctx, sp_ref[l], w1_ref[l], wc2_ref[l], w2_ref[l],
                              d=d, h=h, hc=hc, c=c)

    xf = lax.fori_loop(0, depth, body, x, unroll=(depth <= 4))
    o_ref[...] = xf.astype(o_ref.dtype)


def _streamed_kernel(x_ref, ctx_ref, sp_ref, w1_ref, wc2_ref, w2_ref, o_ref, act_ref,
                     *, d, h, hc, c):
    """Grid = (row_tiles, depth), depth innermost ('arbitrary').  act_ref carries
    the f32 activation tile across depth; weights stream one depth slice/step."""
    l = pl.program_id(1)

    @pl.when(l == 0)
    def _():
        act_ref[...] = x_ref[...].astype(jnp.float32)

    ctx = ctx_ref[...].astype(jnp.float32)
    new_x = _block_compute(act_ref[...], ctx, sp_ref[0], w1_ref[0], wc2_ref[0],
                           w2_ref[0], d=d, h=h, hc=hc, c=c)
    act_ref[...] = new_x

    @pl.when(l == pl.num_programs(1) - 1)
    def _():
        o_ref[...] = new_x.astype(o_ref.dtype)


def gmlp_forward_pallas(x, ctx, params, *, tile_rows=None, interpret=False):
    """x: (B, S, D), ctx: (B, S, 5) -> (B, S, D) in x.dtype."""
    b, s, d = x.shape
    c = ctx.shape[-1]
    n = b * s

    sp, w1, wc2, w2 = params["smallp"], params["w1"], params["wc2"], params["w2"]
    depth, _, two_h = w1.shape
    h = two_h // 2
    hc = wc2.shape[1]

    x2d = x.reshape(n, d)           # free reshapes; no wrapper-side casts or pads
    ctx2d = ctx.reshape(n, c)

    budget = _vmem_budget_bytes()

    # Weight residency: keep all depth-stacked weights in VMEM when they fit in
    # half the budget (removes the per-row-tile weight re-stream entirely).
    resident_bytes = sp.nbytes + w1.nbytes + wc2.nbytes + w2.nbytes
    stream_bytes = 2 * resident_bytes // max(depth, 1)      # double-buffered slices
    weights_resident = resident_bytes <= budget // 2
    fixed_bytes = resident_bytes if weights_resident else stream_bytes

    # Row-tile sizing from the remaining VMEM: double-buffered io blocks plus the
    # f32 per-layer temporaries (x, xn, y/u/v, h, c).
    per_row_bytes = (2 * x2d.dtype.itemsize * 2 * d            # x block + out block
                     + 2 * ctx2d.dtype.itemsize * c            # ctx block
                     + 4 * (2 * d + 3 * two_h + hc + h))
    if tile_rows is None:
        tm = max((budget - fixed_bytes) // per_row_bytes, 8)
        tm = min(tm, 1024)
        if n >= 1024:               # keep >= 4 row tiles: v7x's 2 TCs + pipeline depth
            tm = min(tm, -(-n // 4))
    else:
        tm = tile_rows
    if tm >= n:
        tm = n                      # single tile; block equals the full row extent
    else:
        tm = max(8, (tm // 8) * 8)  # sublane-aligned; ragged tail masked by Pallas
    grid_rows = -(-n // tm)

    out_shape = jax.ShapeDtypeStruct((n, d), x2d.dtype)

    if weights_resident:
        kernel = partial(_resident_kernel, depth=depth, d=d, h=h, hc=hc, c=c)
        grid = (grid_rows,)
        vmem_full = pl.BlockSpec(memory_space=pltpu.MemorySpace.VMEM)
        in_specs = [
            pl.BlockSpec((tm, d), lambda i: (i, 0)),
            pl.BlockSpec((tm, c), lambda i: (i, 0)),
            vmem_full, vmem_full, vmem_full, vmem_full,
        ]
        out_specs = pl.BlockSpec((tm, d), lambda i: (i, 0))
        scratch_shapes = []
        dim_sem = ("parallel",)
    else:
        kernel = partial(_streamed_kernel, d=d, h=h, hc=hc, c=c)
        grid = (grid_rows, depth)

        def _rows(i, l):
            return (i, 0)

        def _slice(i, l):
            return (l, 0, 0)

        in_specs = [
            pl.BlockSpec((tm, d), _rows),
            pl.BlockSpec((tm, c), _rows),
            pl.BlockSpec((1,) + sp.shape[1:], _slice),
            pl.BlockSpec((1,) + w1.shape[1:], _slice),
            pl.BlockSpec((1,) + wc2.shape[1:], _slice),
            pl.BlockSpec((1,) + w2.shape[1:], _slice),
        ]
        out_specs = pl.BlockSpec((tm, d), _rows)
        scratch_shapes = [pltpu.VMEM((tm, d), jnp.float32)]
        dim_sem = ("parallel", "arbitrary")

    out2d = pl.pallas_call(
        kernel,
        out_shape=out_shape,
        grid=grid,
        in_specs=in_specs,
        out_specs=out_specs,
        scratch_shapes=scratch_shapes,
        compiler_params=pltpu.CompilerParams(
            dimension_semantics=dim_sem,
            vmem_limit_bytes=budget,
        ),
        interpret=interpret,
    )(x2d, ctx2d, sp, w1, wc2, w2)

    return out2d.reshape(b, s, d)


def init_gmlp_params(key, input_dim, hidden_dim, ctx_dim=5, depth=2,
                     matmul_dtype=jnp.bfloat16):
    """Deterministic synthetic parameters, depth-stacked.
    MXU weights (w1, wc2, w2) are pre-transposed to (in, out) and stored in
    `matmul_dtype`; all small params are packed into one f32 array `smallp`.
    For production, keep input_dim / hidden_dim multiples of 128 (ideally 256 on
    v6e/v7x) for lane-dense MXU tiles and output stores."""
    d, h, c = input_dim, hidden_dim, ctx_dim
    hc = h // 2
    wp = _round_up(max(d, 2 * h), 128)
    rs = _round_up(6 + c, 8)

    def linear(k, fan_in, fan_out):
        kw, kb = jax.random.split(k)
        lim = fan_in ** -0.5
        w = jax.random.uniform(kw, (fan_in, fan_out), jnp.float32, -lim, lim)
        bvec = jax.random.uniform(kb, (fan_out,), jnp.float32, -lim, lim)
        return w, bvec

    w1s, wc2s, w2s, sps = [], [], [], []
    for blk in range(depth):
        kb = jax.random.fold_in(key, blk)
        k1, k2, k3, k4 = jax.random.split(kb, 4)
        w1, b1 = linear(k1, d, 2 * h)            # channel_proj1
        wc1, bc1 = linear(k2, c, hc)             # GatingUnit.ln[0]
        wc2, bc2 = linear(k3, hc, h)             # GatingUnit.ln[2]
        w2, b2 = linear(k4, h, d)                # channel_proj2
        sp = jnp.zeros((rs, wp), jnp.float32)
        sp = sp.at[0, :d].set(jnp.ones((d,), jnp.float32))   # gamma
        sp = sp.at[1, :d].set(jnp.zeros((d,), jnp.float32))  # beta
        sp = sp.at[2, :2 * h].set(b1)
        sp = sp.at[3, :hc].set(bc1)
        sp = sp.at[4, :h].set(bc2)
        sp = sp.at[5, :d].set(b2)
        sp = sp.at[6:6 + c, :hc].set(wc1)
        w1s.append(w1); wc2s.append(wc2); w2s.append(w2); sps.append(sp)

    return {
        "w1": jnp.stack(w1s).astype(matmul_dtype),
        "wc2": jnp.stack(wc2s).astype(matmul_dtype),
        "w2": jnp.stack(w2s).astype(matmul_dtype),
        "smallp": jnp.stack(sps),
    }


# --- pure-JAX reference: f32 activations, exact GELU (PyTorch semantics) -------
def _ref_forward(x, ctx, params):
    b, s, d = x.shape
    c = ctx.shape[-1]
    n = b * s
    depth, _, two_h = params["w1"].shape
    h = two_h // 2
    hc = params["wc2"].shape[1]
    x2d = x.reshape(n, d).astype(jnp.float32)
    ctx2d = ctx.reshape(n, c).astype(jnp.float32)
    for l in range(depth):
        sp = params["smallp"][l]
        gamma, beta = sp[0, :d], sp[1, :d]
        b1, bc1, bc2, b2 = sp[2, :2 * h], sp[3, :hc], sp[4, :h], sp[5, :d]
        wc1 = sp[6:6 + c, :hc]
        w1 = params["w1"][l].astype(jnp.float32)
        wc2 = params["wc2"][l].astype(jnp.float32)
        w2 = params["w2"][l].astype(jnp.float32)
        res = x2d
        mean = jnp.mean(x2d, -1, keepdims=True)
        var = jnp.mean((x2d - mean) ** 2, -1, keepdims=True)
        xn = (x2d - mean) / jnp.sqrt(var + 1e-5) * gamma + beta
        y = xn @ w1 + b1
        u, v = y[:, :h], y[:, h:]
        u = u * jnp.clip(u + 3.0, 0.0, 6.0) / 6.0
        cm = jax.nn.gelu(ctx2d @ wc1 + bc1, approximate=False) @ wc2 + bc2
        v = jax.nn.sigmoid(v + cm)
        x2d = (u * v) @ w2 + b2 + res
    return x2d.reshape(b, s, d)


if __name__ == "__main__":
    # Small shapes: batch=2, seq=8, input_dim=16, hidden_dim=32, depth=2, ctx=5.
    B, S, D, H, DEPTH, C = 2, 8, 16, 32, 2, 5

    key = jax.random.PRNGKey(0)
    kx, kc, kp = jax.random.split(key, 3)
    x = jax.random.normal(kx, (B, S, D), jnp.float32).astype(jnp.bfloat16)
    ctx = jax.random.normal(kc, (B, S, C), jnp.float32).astype(jnp.bfloat16)
    params = init_gmlp_params(kp, D, H, ctx_dim=C, depth=DEPTH)

    out = gmlp_forward_pallas(x, ctx, params)
    out = jax.block_until_ready(out)

    ref = _ref_forward(x, ctx, params)
    assert out.shape == (B, S, D)
    err = float(jnp.max(jnp.abs(out.astype(jnp.float32) - ref)))
    # bf16 MXU operands / bf16 output / tanh-GELU vs f32 exact reference.
    assert err < 3e-2, f"max abs err {err}"
    print("KERNEL_OK")
</pallas_src>

<mosaic_0001>
module attributes {stable_mosaic.version = 11 : i64} {
  func.func @_resident_kernel(%arg0: i32, %arg1: memref<16x16xbf16, #tpu.memory_space<vmem>>, %arg2: memref<16x5xbf16, #tpu.memory_space<vmem>>, %arg3: memref<2x16x128xf32, #tpu.memory_space<vmem>>, %arg4: memref<2x16x64xbf16, #tpu.memory_space<vmem>>, %arg5: memref<2x16x32xbf16, #tpu.memory_space<vmem>>, %arg6: memref<2x32x16xbf16, #tpu.memory_space<vmem>>, %arg7: memref<16x16xbf16, #tpu.memory_space<vmem>>) attributes {dimension_semantics = [#tpu.dimension_semantics<parallel>], iteration_bounds = array<i64: 1>, scalar_prefetch = 0 : i64, scratch_operands = 0 : i64, tpu.core_type = #tpu.core_type<tc>, window_params = [{transform_indices = @transform_0, window_bounds = array<i64: 16, 16>}, {transform_indices = @transform_1, window_bounds = array<i64: 16, 5>}, {pipeline_mode = #tpu.pipeline_mode<synchronous>, transform_indices = @transform_2, window_bounds = array<i64: 2, 16, 128>}, {pipeline_mode = #tpu.pipeline_mode<synchronous>, transform_indices = @transform_3, window_bounds = array<i64: 2, 16, 64>}, {pipeline_mode = #tpu.pipeline_mode<synchronous>, transform_indices = @transform_4, window_bounds = array<i64: 2, 16, 32>}, {pipeline_mode = #tpu.pipeline_mode<synchronous>, transform_indices = @transform_5, window_bounds = array<i64: 2, 32, 16>}, {transform_indices = @transform_6, window_bounds = array<i64: 16, 16>}]} {
    %c0 = arith.constant 0 : index
    %c0_0 = arith.constant 0 : index
    %0 = vector.load %arg1[%c0, %c0_0] : memref<16x16xbf16, #tpu.memory_space<vmem>>, vector<16x16xbf16>
    %1 = arith.extf %0 : vector<16x16xbf16> to vector<16x16xf32>
    %c0_1 = arith.constant 0 : index
    %c0_2 = arith.constant 0 : index
    %2 = vector.load %arg2[%c0_1, %c0_2] : memref<16x5xbf16, #tpu.memory_space<vmem>>, vector<16x5xbf16>
    %3 = arith.extf %2 : vector<16x5xbf16> to vector<16x5xf32>
    %c0_i32 = arith.constant 0 : i32
    %4 = arith.index_cast %c0_i32 : i32 to index
    %c0_3 = arith.constant 0 : index
    %c0_4 = arith.constant 0 : index
    %5 = vector.load %arg3[%4, %c0_3, %c0_4] : memref<2x16x128xf32, #tpu.memory_space<vmem>>, vector<1x16x128xf32>
    %6 = vector.shape_cast %5 : vector<1x16x128xf32> to vector<16x128xf32>
    %7 = arith.index_cast %c0_i32 : i32 to index
    %c0_5 = arith.constant 0 : index
    %c0_6 = arith.constant 0 : index
    %8 = vector.load %arg4[%7, %c0_5, %c0_6] : memref<2x16x64xbf16, #tpu.memory_space<vmem>>, vector<1x16x64xbf16>
    %9 = vector.shape_cast %8 : vector<1x16x64xbf16> to vector<16x64xbf16>
    %10 = arith.index_cast %c0_i32 : i32 to index
    %c0_7 = arith.constant 0 : index
    %c0_8 = arith.constant 0 : index
    %11 = vector.load %arg5[%10, %c0_7, %c0_8] : memref<2x16x32xbf16, #tpu.memory_space<vmem>>, vector<1x16x32xbf16>
    %12 = vector.shape_cast %11 : vector<1x16x32xbf16> to vector<16x32xbf16>
    %13 = arith.index_cast %c0_i32 : i32 to index
    %c0_9 = arith.constant 0 : index
    %c0_10 = arith.constant 0 : index
    %14 = vector.load %arg6[%13, %c0_9, %c0_10] : memref<2x32x16xbf16, #tpu.memory_space<vmem>>, vector<1x32x16xbf16>
    %15 = vector.shape_cast %14 : vector<1x32x16xbf16> to vector<32x16xbf16>
    %16 = vector.extract_strided_slice %6 {offsets = [0, 0], sizes = [1, 16], strides = [1, 1]} : vector<16x128xf32> to vector<1x16xf32>
    %17 = vector.shape_cast %16 : vector<1x16xf32> to vector<16xf32>
    %18 = vector.extract_strided_slice %6 {offsets = [1, 0], sizes = [1, 16], strides = [1, 1]} : vector<16x128xf32> to vector<1x16xf32>
    %19 = vector.shape_cast %18 : vector<1x16xf32> to vector<16xf32>
    %20 = vector.extract_strided_slice %6 {offsets = [2, 0], sizes = [1, 64], strides = [1, 1]} : vector<16x128xf32> to vector<1x64xf32>
    %21 = vector.shape_cast %20 : vector<1x64xf32> to vector<64xf32>
    %22 = vector.extract_strided_slice %6 {offsets = [3, 0], sizes = [1, 16], strides = [1, 1]} : vector<16x128xf32> to vector<1x16xf32>
    %23 = vector.shape_cast %22 : vector<1x16xf32> to vector<16xf32>
    %24 = vector.extract_strided_slice %6 {offsets = [4, 0], sizes = [1, 32], strides = [1, 1]} : vector<16x128xf32> to vector<1x32xf32>
    %25 = vector.shape_cast %24 : vector<1x32xf32> to vector<32xf32>
    %26 = vector.extract_strided_slice %6 {offsets = [5, 0], sizes = [1, 16], strides = [1, 1]} : vector<16x128xf32> to vector<1x16xf32>
    %27 = vector.shape_cast %26 : vector<1x16xf32> to vector<16xf32>
    %cst = arith.constant dense<0.000000e+00> : vector<16xf32>
    %28 = vector.multi_reduction <add>, %1, %cst [1] : vector<16x16xf32> to vector<16xf32>
    %29 = vector.shape_cast %28 : vector<16xf32> to vector<16x1xf32>
    %cst_11 = arith.constant 1.600000e+01 : f32
    %30 = vector.broadcast %cst_11 : f32 to vector<16x1xf32>
    %31 = arith.divf %29, %30 : vector<16x1xf32>
    %32 = vector.broadcast %31 : vector<16x1xf32> to vector<16x16xf32>
    %33 = arith.subf %1, %32 : vector<16x16xf32>
    %34 = arith.mulf %33, %33 : vector<16x16xf32>
    %cst_12 = arith.constant dense<0.000000e+00> : vector<16xf32>
    %35 = vector.multi_reduction <add>, %34, %cst_12 [1] : vector<16x16xf32> to vector<16xf32>
    %36 = vector.shape_cast %35 : vector<16xf32> to vector<16x1xf32>
    %cst_13 = arith.constant 1.600000e+01 : f32
    %37 = vector.broadcast %cst_13 : f32 to vector<16x1xf32>
    %38 = arith.divf %36, %37 : vector<16x1xf32>
    %39 = vector.broadcast %31 : vector<16x1xf32> to vector<16x16xf32>
    %40 = arith.subf %1, %39 : vector<16x16xf32>
    %cst_14 = arith.constant 9.99999974E-6 : f32
    %41 = vector.broadcast %cst_14 : f32 to vector<16x1xf32>
    %42 = arith.addf %38, %41 : vector<16x1xf32>
    %43 = math.rsqrt %42 : vector<16x1xf32>
    %44 = vector.broadcast %43 : vector<16x1xf32> to vector<16x16xf32>
    %45 = arith.mulf %40, %44 : vector<16x16xf32>
    %46 = vector.shape_cast %17 : vector<16xf32> to vector<1x16xf32>
    %47 = vector.broadcast %46 : vector<1x16xf32> to vector<16x16xf32>
    %48 = arith.mulf %45, %47 : vector<16x16xf32>
    %49 = vector.shape_cast %19 : vector<16xf32> to vector<1x16xf32>
    %50 = vector.broadcast %49 : vector<1x16xf32> to vector<16x16xf32>
    %51 = arith.addf %48, %50 : vector<16x16xf32>
    %52 = arith.truncf %51 : vector<16x16xf32> to vector<16x16xbf16>
    %cst_15 = arith.constant dense<0.000000e+00> : vector<16x64xf32>
    %53 = tpu.matmul %52, %9, %cst_15 {dimension_numbers = #tpu.dot_dimension_numbers<[1], [0], [0], [1], [0, 0, 1, 1], [], []>} : vector<16x16xbf16>, vector<16x64xbf16>, vector<16x64xf32> -> vector<16x64xf32>
    %54 = vector.shape_cast %21 : vector<64xf32> to vector<1x64xf32>
    %55 = vector.broadcast %54 : vector<1x64xf32> to vector<16x64xf32>
    %56 = arith.addf %53, %55 : vector<16x64xf32>
    %57 = vector.extract_strided_slice %56 {offsets = [0, 0], sizes = [16, 32], strides = [1, 1]} : vector<16x64xf32> to vector<16x32xf32>
    %58 = vector.extract_strided_slice %56 {offsets = [0, 32], sizes = [16, 32], strides = [1, 1]} : vector<16x64xf32> to vector<16x32xf32>
    %cst_16 = arith.constant 3.000000e+00 : f32
    %59 = vector.broadcast %cst_16 : f32 to vector<16x32xf32>
    %60 = arith.addf %57, %59 : vector<16x32xf32>
    %cst_17 = arith.constant 0.000000e+00 : f32
    %cst_18 = arith.constant 6.000000e+00 : f32
    %61 = vector.broadcast %cst_17 : f32 to vector<16x32xf32>
    %62 = arith.maximumf %61, %60 : vector<16x32xf32>
    %63 = vector.broadcast %cst_18 : f32 to vector<16x32xf32>
    %64 = arith.minimumf %63, %62 : vector<16x32xf32>
    %65 = arith.mulf %57, %64 : vector<16x32xf32>
    %cst_19 = arith.constant 0.166666672 : f32
    %66 = vector.broadcast %cst_19 : f32 to vector<16x32xf32>
    %67 = arith.mulf %65, %66 : vector<16x32xf32>
    %68 = vector.extract_strided_slice %3 {offsets = [0, 0], sizes = [16, 1], strides = [1, 1]} : vector<16x5xf32> to vector<16x1xf32>
    %69 = vector.extract_strided_slice %6 {offsets = [6, 0], sizes = [1, 16], strides = [1, 1]} : vector<16x128xf32> to vector<1x16xf32>
    %70 = vector.shape_cast %69 : vector<1x16xf32> to vector<16xf32>
    %71 = vector.shape_cast %70 : vector<16xf32> to vector<1x16xf32>
    %72 = vector.broadcast %68 : vector<16x1xf32> to vector<16x16xf32>
    %73 = vector.broadcast %71 : vector<1x16xf32> to vector<16x16xf32>
    %74 = arith.mulf %72, %73 : vector<16x16xf32>
    %75 = vector.shape_cast %23 : vector<16xf32> to vector<1x16xf32>
    %76 = vector.broadcast %75 : vector<1x16xf32> to vector<16x16xf32>
    %77 = arith.addf %76, %74 : vector<16x16xf32>
    %78 = vector.extract_strided_slice %3 {offsets = [0, 1], sizes = [16, 1], strides = [1, 1]} : vector<16x5xf32> to vector<16x1xf32>
    %79 = vector.extract_strided_slice %6 {offsets = [7, 0], sizes = [1, 16], strides = [1, 1]} : vector<16x128xf32> to vector<1x16xf32>
    %80 = vector.shape_cast %79 : vector<1x16xf32> to vector<16xf32>
    %81 = vector.shape_cast %80 : vector<16xf32> to vector<1x16xf32>
    %82 = vector.broadcast %78 : vector<16x1xf32> to vector<16x16xf32>
    %83 = vector.broadcast %81 : vector<1x16xf32> to vector<16x16xf32>
    %84 = arith.mulf %82, %83 : vector<16x16xf32>
    %85 = arith.addf %77, %84 : vector<16x16xf32>
    %86 = vector.extract_strided_slice %3 {offsets = [0, 2], sizes = [16, 1], strides = [1, 1]} : vector<16x5xf32> to vector<16x1xf32>
    %87 = vector.extract_strided_slice %6 {offsets = [8, 0], sizes = [1, 16], strides = [1, 1]} : vector<16x128xf32> to vector<1x16xf32>
    %88 = vector.shape_cast %87 : vector<1x16xf32> to vector<16xf32>
    %89 = vector.shape_cast %88 : vector<16xf32> to vector<1x16xf32>
    %90 = vector.broadcast %86 : vector<16x1xf32> to vector<16x16xf32>
    %91 = vector.broadcast %89 : vector<1x16xf32> to vector<16x16xf32>
    %92 = arith.mulf %90, %91 : vector<16x16xf32>
    %93 = arith.addf %85, %92 : vector<16x16xf32>
    %94 = vector.extract_strided_slice %3 {offsets = [0, 3], sizes = [16, 1], strides = [1, 1]} : vector<16x5xf32> to vector<16x1xf32>
    %95 = vector.extract_strided_slice %6 {offsets = [9, 0], sizes = [1, 16], strides = [1, 1]} : vector<16x128xf32> to vector<1x16xf32>
    %96 = vector.shape_cast %95 : vector<1x16xf32> to vector<16xf32>
    %97 = vector.shape_cast %96 : vector<16xf32> to vector<1x16xf32>
    %98 = vector.broadcast %94 : vector<16x1xf32> to vector<16x16xf32>
    %99 = vector.broadcast %97 : vector<1x16xf32> to vector<16x16xf32>
    %100 = arith.mulf %98, %99 : vector<16x16xf32>
    %101 = arith.addf %93, %100 : vector<16x16xf32>
    %102 = vector.extract_strided_slice %3 {offsets = [0, 4], sizes = [16, 1], strides = [1, 1]} : vector<16x5xf32> to vector<16x1xf32>
    %103 = vector.extract_strided_slice %6 {offsets = [10, 0], sizes = [1, 16], strides = [1, 1]} : vector<16x128xf32> to vector<1x16xf32>
    %104 = vector.shape_cast %103 : vector<1x16xf32> to vector<16xf32>
    %105 = vector.shape_cast %104 : vector<16xf32> to vector<1x16xf32>
    %106 = vector.broadcast %102 : vector<16x1xf32> to vector<16x16xf32>
    %107 = vector.broadcast %105 : vector<1x16xf32> to vector<16x16xf32>
    %108 = arith.mulf %106, %107 : vector<16x16xf32>
    %109 = arith.addf %101, %108 : vector<16x16xf32>
    %110 = arith.mulf %109, %109 : vector<16x16xf32>
    %111 = arith.mulf %109, %110 : vector<16x16xf32>
    %cst_20 = arith.constant 4.471500e-02 : f32
    %112 = vector.broadcast %cst_20 : f32 to vector<16x16xf32>
    %113 = arith.mulf %112, %111 : vector<16x16xf32>
    %114 = arith.addf %109, %113 : vector<16x16xf32>
    %cst_21 = arith.constant 0.797884583 : f32
    %115 = vector.broadcast %cst_21 : f32 to vector<16x16xf32>
    %116 = arith.mulf %115, %114 : vector<16x16xf32>
    %117 = math.tanh %116 : vector<16x16xf32>
    %cst_22 = arith.constant 1.000000e+00 : f32
    %118 = vector.broadcast %cst_22 : f32 to vector<16x16xf32>
    %119 = arith.addf %118, %117 : vector<16x16xf32>
    %cst_23 = arith.constant 5.000000e-01 : f32
    %120 = vector.broadcast %cst_23 : f32 to vector<16x16xf32>
    %121 = arith.mulf %120, %119 : vector<16x16xf32>
    %122 = arith.mulf %109, %121 : vector<16x16xf32>
    %123 = arith.truncf %122 : vector<16x16xf32> to vector<16x16xbf16>
    %cst_24 = arith.constant dense<0.000000e+00> : vector<16x32xf32>
    %124 = tpu.matmul %123, %12, %cst_24 {dimension_numbers = #tpu.dot_dimension_numbers<[1], [0], [0], [1], [0, 0, 1, 1], [], []>} : vector<16x16xbf16>, vector<16x32xbf16>, vector<16x32xf32> -> vector<16x32xf32>
    %125 = vector.shape_cast %25 : vector<32xf32> to vector<1x32xf32>
    %126 = vector.broadcast %125 : vector<1x32xf32> to vector<16x32xf32>
    %127 = arith.addf %124, %126 : vector<16x32xf32>
    %128 = arith.addf %58, %127 : vector<16x32xf32>
    %129 = arith.negf %128 : vector<16x32xf32>
    %130 = math.exp %129 : vector<16x32xf32>
    %cst_25 = arith.constant 1.000000e+00 : f32
    %131 = vector.broadcast %cst_25 : f32 to vector<16x32xf32>
    %132 = arith.addf %131, %130 : vector<16x32xf32>
    %133 = arith.divf %131, %132 : vector<16x32xf32>
    %134 = arith.mulf %67, %133 : vector<16x32xf32>
    %135 = arith.truncf %134 : vector<16x32xf32> to vector<16x32xbf16>
    %cst_26 = arith.constant dense<0.000000e+00> : vector<16x16xf32>
    %136 = tpu.matmul %135, %15, %cst_26 {dimension_numbers = #tpu.dot_dimension_numbers<[1], [0], [0], [1], [0, 0, 1, 1], [], []>} : vector<16x32xbf16>, vector<32x16xbf16>, vector<16x16xf32> -> vector<16x16xf32>
    %137 = vector.shape_cast %27 : vector<16xf32> to vector<1x16xf32>
    %138 = vector.broadcast %137 : vector<1x16xf32> to vector<16x16xf32>
    %139 = arith.addf %136, %138 : vector<16x16xf32>
    %140 = arith.addf %139, %1 : vector<16x16xf32>
    %c1_i32 = arith.constant 1 : i32
    %141 = arith.index_cast %c1_i32 : i32 to index
    %c0_27 = arith.constant 0 : index
    %c0_28 = arith.constant 0 : index
    %142 = vector.load %arg3[%141, %c0_27, %c0_28] : memref<2x16x128xf32, #tpu.memory_space<vmem>>, vector<1x16x128xf32>
    %143 = vector.shape_cast %142 : vector<1x16x128xf32> to vector<16x128xf32>
    %144 = arith.index_cast %c1_i32 : i32 to index
    %c0_29 = arith.constant 0 : index
    %c0_30 = arith.constant 0 : index
    %145 = vector.load %arg4[%144, %c0_29, %c0_30] : memref<2x16x64xbf16, #tpu.memory_space<vmem>>, vector<1x16x64xbf16>
    %146 = vector.shape_cast %145 : vector<1x16x64xbf16> to vector<16x64xbf16>
    %147 = arith.index_cast %c1_i32 : i32 to index
    %c0_31 = arith.constant 0 : index
    %c0_32 = arith.constant 0 : index
    %148 = vector.load %arg5[%147, %c0_31, %c0_32] : memref<2x16x32xbf16, #tpu.memory_space<vmem>>, vector<1x16x32xbf16>
    %149 = vector.shape_cast %148 : vector<1x16x32xbf16> to vector<16x32xbf16>
    %150 = arith.index_cast %c1_i32 : i32 to index
    %c0_33 = arith.constant 0 : index
    %c0_34 = arith.constant 0 : index
    %151 = vector.load %arg6[%150, %c0_33, %c0_34] : memref<2x32x16xbf16, #tpu.memory_space<vmem>>, vector<1x32x16xbf16>
    %152 = vector.shape_cast %151 : vector<1x32x16xbf16> to vector<32x16xbf16>
    %153 = vector.extract_strided_slice %143 {offsets = [0, 0], sizes = [1, 16], strides = [1, 1]} : vector<16x128xf32> to vector<1x16xf32>
    %154 = vector.shape_cast %153 : vector<1x16xf32> to vector<16xf32>
    %155 = vector.extract_strided_slice %143 {offsets = [1, 0], sizes = [1, 16], strides = [1, 1]} : vector<16x128xf32> to vector<1x16xf32>
    %156 = vector.shape_cast %155 : vector<1x16xf32> to vector<16xf32>
    %157 = vector.extract_strided_slice %143 {offsets = [2, 0], sizes = [1, 64], strides = [1, 1]} : vector<16x128xf32> to vector<1x64xf32>
    %158 = vector.shape_cast %157 : vector<1x64xf32> to vector<64xf32>
    %159 = vector.extract_strided_slice %143 {offsets = [3, 0], sizes = [1, 16], strides = [1, 1]} : vector<16x128xf32> to vector<1x16xf32>
    %160 = vector.shape_cast %159 : vector<1x16xf32> to vector<16xf32>
    %161 = vector.extract_strided_slice %143 {offsets = [4, 0], sizes = [1, 32], strides = [1, 1]} : vector<16x128xf32> to vector<1x32xf32>
    %162 = vector.shape_cast %161 : vector<1x32xf32> to vector<32xf32>
    %163 = vector.extract_strided_slice %143 {offsets = [5, 0], sizes = [1, 16], strides = [1, 1]} : vector<16x128xf32> to vector<1x16xf32>
    %164 = vector.shape_cast %163 : vector<1x16xf32> to vector<16xf32>
    %cst_35 = arith.constant dense<0.000000e+00> : vector<16xf32>
    %165 = vector.multi_reduction <add>, %140, %cst_35 [1] : vector<16x16xf32> to vector<16xf32>
    %166 = vector.shape_cast %165 : vector<16xf32> to vector<16x1xf32>
    %cst_36 = arith.constant 1.600000e+01 : f32
    %167 = vector.broadcast %cst_36 : f32 to vector<16x1xf32>
    %168 = arith.divf %166, %167 : vector<16x1xf32>
    %169 = vector.broadcast %168 : vector<16x1xf32> to vector<16x16xf32>
    %170 = arith.subf %140, %169 : vector<16x16xf32>
    %171 = arith.mulf %170, %170 : vector<16x16xf32>
    %cst_37 = arith.constant dense<0.000000e+00> : vector<16xf32>
    %172 = vector.multi_reduction <add>, %171, %cst_37 [1] : vector<16x16xf32> to vector<16xf32>
    %173 = vector.shape_cast %172 : vector<16xf32> to vector<16x1xf32>
    %cst_38 = arith.constant 1.600000e+01 : f32
    %174 = vector.broadcast %cst_38 : f32 to vector<16x1xf32>
    %175 = arith.divf %173, %174 : vector<16x1xf32>
    %176 = vector.broadcast %168 : vector<16x1xf32> to vector<16x16xf32>
    %177 = arith.subf %140, %176 : vector<16x16xf32>
    %cst_39 = arith.constant 9.99999974E-6 : f32
    %178 = vector.broadcast %cst_39 : f32 to vector<16x1xf32>
    %179 = arith.addf %175, %178 : vector<16x1xf32>
    %180 = math.rsqrt %179 : vector<16x1xf32>
    %181 = vector.broadcast %180 : vector<16x1xf32> to vector<16x16xf32>
    %182 = arith.mulf %177, %181 : vector<16x16xf32>
    %183 = vector.shape_cast %154 : vector<16xf32> to vector<1x16xf32>
    %184 = vector.broadcast %183 : vector<1x16xf32> to vector<16x16xf32>
    %185 = arith.mulf %182, %184 : vector<16x16xf32>
    %186 = vector.shape_cast %156 : vector<16xf32> to vector<1x16xf32>
    %187 = vector.broadcast %186 : vector<1x16xf32> to vector<16x16xf32>
    %188 = arith.addf %185, %187 : vector<16x16xf32>
    %189 = arith.truncf %188 : vector<16x16xf32> to vector<16x16xbf16>
    %cst_40 = arith.constant dense<0.000000e+00> : vector<16x64xf32>
    %190 = tpu.matmul %189, %146, %cst_40 {dimension_numbers = #tpu.dot_dimension_numbers<[1], [0], [0], [1], [0, 0, 1, 1], [], []>} : vector<16x16xbf16>, vector<16x64xbf16>, vector<16x64xf32> -> vector<16x64xf32>
    %191 = vector.shape_cast %158 : vector<64xf32> to vector<1x64xf32>
    %192 = vector.broadcast %191 : vector<1x64xf32> to vector<16x64xf32>
    %193 = arith.addf %190, %192 : vector<16x64xf32>
    %194 = vector.extract_strided_slice %193 {offsets = [0, 0], sizes = [16, 32], strides = [1, 1]} : vector<16x64xf32> to vector<16x32xf32>
    %195 = vector.extract_strided_slice %193 {offsets = [0, 32], sizes = [16, 32], strides = [1, 1]} : vector<16x64xf32> to vector<16x32xf32>
    %cst_41 = arith.constant 3.000000e+00 : f32
    %196 = vector.broadcast %cst_41 : f32 to vector<16x32xf32>
    %197 = arith.addf %194, %196 : vector<16x32xf32>
    %cst_42 = arith.constant 0.000000e+00 : f32
    %cst_43 = arith.constant 6.000000e+00 : f32
    %198 = vector.broadcast %cst_42 : f32 to vector<16x32xf32>
    %199 = arith.maximumf %198, %197 : vector<16x32xf32>
    %200 = vector.broadcast %cst_43 : f32 to vector<16x32xf32>
    %201 = arith.minimumf %200, %199 : vector<16x32xf32>
    %202 = arith.mulf %194, %201 : vector<16x32xf32>
    %cst_44 = arith.constant 0.166666672 : f32
    %203 = vector.broadcast %cst_44 : f32 to vector<16x32xf32>
    %204 = arith.mulf %202, %203 : vector<16x32xf32>
    %205 = vector.extract_strided_slice %3 {offsets = [0, 0], sizes = [16, 1], strides = [1, 1]} : vector<16x5xf32> to vector<16x1xf32>
    %206 = vector.extract_strided_slice %143 {offsets = [6, 0], sizes = [1, 16], strides = [1, 1]} : vector<16x128xf32> to vector<1x16xf32>
    %207 = vector.shape_cast %206 : vector<1x16xf32> to vector<16xf32>
    %208 = vector.shape_cast %207 : vector<16xf32> to vector<1x16xf32>
    %209 = vector.broadcast %205 : vector<16x1xf32> to vector<16x16xf32>
    %210 = vector.broadcast %208 : vector<1x16xf32> to vector<16x16xf32>
    %211 = arith.mulf %209, %210 : vector<16x16xf32>
    %212 = vector.shape_cast %160 : vector<16xf32> to vector<1x16xf32>
    %213 = vector.broadcast %212 : vector<1x16xf32> to vector<16x16xf32>
    %214 = arith.addf %213, %211 : vector<16x16xf32>
    %215 = vector.extract_strided_slice %3 {offsets = [0, 1], sizes = [16, 1], strides = [1, 1]} : vector<16x5xf32> to vector<16x1xf32>
    %216 = vector.extract_strided_slice %143 {offsets = [7, 0], sizes = [1, 16], strides = [1, 1]} : vector<16x128xf32> to vector<1x16xf32>
    %217 = vector.shape_cast %216 : vector<1x16xf32> to vector<16xf32>
    %218 = vector.shape_cast %217 : vector<16xf32> to vector<1x16xf32>
    %219 = vector.broadcast %215 : vector<16x1xf32> to vector<16x16xf32>
    %220 = vector.broadcast %218 : vector<1x16xf32> to vector<16x16xf32>
    %221 = arith.mulf %219, %220 : vector<16x16xf32>
    %222 = arith.addf %214, %221 : vector<16x16xf32>
    %223 = vector.extract_strided_slice %3 {offsets = [0, 2], sizes = [16, 1], strides = [1, 1]} : vector<16x5xf32> to vector<16x1xf32>
    %224 = vector.extract_strided_slice %143 {offsets = [8, 0], sizes = [1, 16], strides = [1, 1]} : vector<16x128xf32> to vector<1x16xf32>
    %225 = vector.shape_cast %224 : vector<1x16xf32> to vector<16xf32>
    %226 = vector.shape_cast %225 : vector<16xf32> to vector<1x16xf32>
    %227 = vector.broadcast %223 : vector<16x1xf32> to vector<16x16xf32>
    %228 = vector.broadcast %226 : vector<1x16xf32> to vector<16x16xf32>
    %229 = arith.mulf %227, %228 : vector<16x16xf32>
    %230 = arith.addf %222, %229 : vector<16x16xf32>
    %231 = vector.extract_strided_slice %3 {offsets = [0, 3], sizes = [16, 1], strides = [1, 1]} : vector<16x5xf32> to vector<16x1xf32>
    %232 = vector.extract_strided_slice %143 {offsets = [9, 0], sizes = [1, 16], strides = [1, 1]} : vector<16x128xf32> to vector<1x16xf32>
    %233 = vector.shape_cast %232 : vector<1x16xf32> to vector<16xf32>
    %234 = vector.shape_cast %233 : vector<16xf32> to vector<1x16xf32>
    %235 = vector.broadcast %231 : vector<16x1xf32> to vector<16x16xf32>
    %236 = vector.broadcast %234 : vector<1x16xf32> to vector<16x16xf32>
    %237 = arith.mulf %235, %236 : vector<16x16xf32>
    %238 = arith.addf %230, %237 : vector<16x16xf32>
    %239 = vector.extract_strided_slice %3 {offsets = [0, 4], sizes = [16, 1], strides = [1, 1]} : vector<16x5xf32> to vector<16x1xf32>
    %240 = vector.extract_strided_slice %143 {offsets = [10, 0], sizes = [1, 16], strides = [1, 1]} : vector<16x128xf32> to vector<1x16xf32>
    %241 = vector.shape_cast %240 : vector<1x16xf32> to vector<16xf32>
    %242 = vector.shape_cast %241 : vector<16xf32> to vector<1x16xf32>
    %243 = vector.broadcast %239 : vector<16x1xf32> to vector<16x16xf32>
    %244 = vector.broadcast %242 : vector<1x16xf32> to vector<16x16xf32>
    %245 = arith.mulf %243, %244 : vector<16x16xf32>
    %246 = arith.addf %238, %245 : vector<16x16xf32>
    %247 = arith.mulf %246, %246 : vector<16x16xf32>
    %248 = arith.mulf %246, %247 : vector<16x16xf32>
    %cst_45 = arith.constant 4.471500e-02 : f32
    %249 = vector.broadcast %cst_45 : f32 to vector<16x16xf32>
    %250 = arith.mulf %249, %248 : vector<16x16xf32>
    %251 = arith.addf %246, %250 : vector<16x16xf32>
    %cst_46 = arith.constant 0.797884583 : f32
    %252 = vector.broadcast %cst_46 : f32 to vector<16x16xf32>
    %253 = arith.mulf %252, %251 : vector<16x16xf32>
    %254 = math.tanh %253 : vector<16x16xf32>
    %cst_47 = arith.constant 1.000000e+00 : f32
    %255 = vector.broadcast %cst_47 : f32 to vector<16x16xf32>
    %256 = arith.addf %255, %254 : vector<16x16xf32>
    %cst_48 = arith.constant 5.000000e-01 : f32
    %257 = vector.broadcast %cst_48 : f32 to vector<16x16xf32>
    %258 = arith.mulf %257, %256 : vector<16x16xf32>
    %259 = arith.mulf %246, %258 : vector<16x16xf32>
    %260 = arith.truncf %259 : vector<16x16xf32> to vector<16x16xbf16>
    %cst_49 = arith.constant dense<0.000000e+00> : vector<16x32xf32>
    %261 = tpu.matmul %260, %149, %cst_49 {dimension_numbers = #tpu.dot_dimension_numbers<[1], [0], [0], [1], [0, 0, 1, 1], [], []>} : vector<16x16xbf16>, vector<16x32xbf16>, vector<16x32xf32> -> vector<16x32xf32>
    %262 = vector.shape_cast %162 : vector<32xf32> to vector<1x32xf32>
    %263 = vector.broadcast %262 : vector<1x32xf32> to vector<16x32xf32>
    %264 = arith.addf %261, %263 : vector<16x32xf32>
    %265 = arith.addf %195, %264 : vector<16x32xf32>
    %266 = arith.negf %265 : vector<16x32xf32>
    %267 = math.exp %266 : vector<16x32xf32>
    %cst_50 = arith.constant 1.000000e+00 : f32
    %268 = vector.broadcast %cst_50 : f32 to vector<16x32xf32>
    %269 = arith.addf %268, %267 : vector<16x32xf32>
    %270 = arith.divf %268, %269 : vector<16x32xf32>
    %271 = arith.mulf %204, %270 : vector<16x32xf32>
    %272 = arith.truncf %271 : vector<16x32xf32> to vector<16x32xbf16>
    %cst_51 = arith.constant dense<0.000000e+00> : vector<16x16xf32>
    %273 = tpu.matmul %272, %152, %cst_51 {dimension_numbers = #tpu.dot_dimension_numbers<[1], [0], [0], [1], [0, 0, 1, 1], [], []>} : vector<16x32xbf16>, vector<32x16xbf16>, vector<16x16xf32> -> vector<16x16xf32>
    %274 = vector.shape_cast %164 : vector<16xf32> to vector<1x16xf32>
    %275 = vector.broadcast %274 : vector<1x16xf32> to vector<16x16xf32>
    %276 = arith.addf %273, %275 : vector<16x16xf32>
    %277 = arith.addf %276, %140 : vector<16x16xf32>
    %c2_i32 = arith.constant 2 : i32
    %278 = arith.truncf %277 : vector<16x16xf32> to vector<16x16xbf16>
    %c0_52 = arith.constant 0 : index
    %c0_53 = arith.constant 0 : index
    %279 = vector.load %arg7[%c0_52, %c0_53] : memref<16x16xbf16, #tpu.memory_space<vmem>>, vector<16x16xbf16>
    tpu.vector_store %arg7[%c0_52, %c0_53], %278 {strides = array<i32>} : memref<16x16xbf16, #tpu.memory_space<vmem>>, vector<16x16xbf16>,
    return
  }
  func.func @transform_0(%arg0: i32) -> (i32, i32) {
    %c0_i32 = arith.constant 0 : i32
    %c0_i32_0 = arith.constant 0 : i32
    return %arg0, %c0_i32 : i32, i32
  }
  func.func @transform_1(%arg0: i32) -> (i32, i32) {
    %c0_i32 = arith.constant 0 : i32
    %c0_i32_0 = arith.constant 0 : i32
    return %arg0, %c0_i32 : i32, i32
  }
  func.func @transform_2(%arg0: i32) -> (i32, i32, i32) {
    %c0_i32 = arith.constant 0 : i32
    %c0_i32_0 = arith.constant 0 : i32
    %c0_i32_1 = arith.constant 0 : i32
    %c0_i32_2 = arith.constant 0 : i32
    return %c0_i32, %c0_i32_0, %c0_i32_1 : i32, i32, i32
  }
  func.func @transform_3(%arg0: i32) -> (i32, i32, i32) {
    %c0_i32 = arith.constant 0 : i32
    %c0_i32_0 = arith.constant 0 : i32
    %c0_i32_1 = arith.constant 0 : i32
    %c0_i32_2 = arith.constant 0 : i32
    return %c0_i32, %c0_i32_0, %c0_i32_1 : i32, i32, i32
  }
  func.func @transform_4(%arg0: i32) -> (i32, i32, i32) {
    %c0_i32 = arith.constant 0 : i32
    %c0_i32_0 = arith.constant 0 : i32
    %c0_i32_1 = arith.constant 0 : i32
    %c0_i32_2 = arith.constant 0 : i32
    return %c0_i32, %c0_i32_0, %c0_i32_1 : i32, i32, i32
  }
  func.func @transform_5(%arg0: i32) -> (i32, i32, i32) {
    %c0_i32 = arith.constant 0 : i32
    %c0_i32_0 = arith.constant 0 : i32
    %c0_i32_1 = arith.constant 0 : i32
    %c0_i32_2 = arith.constant 0 : i32
    return %c0_i32, %c0_i32_0, %c0_i32_1 : i32, i32, i32
  }
  func.func @transform_6(%arg0: i32) -> (i32, i32) {
    %c0_i32 = arith.constant 0 : i32
    %c0_i32_0 = arith.constant 0 : i32
    return %arg0, %c0_i32 : i32, i32
  }
}

</mosaic_0001>

<llo_original>
// kernel: tpu_custom_call.1
$region0: #{tpu_custom_call.1}
  #allocation0 [shape = 'u32[]', space=smem, size = 0x4, offset = 0x4, fixed_abs, tag = 'smem constant byte address 0x4 - core index']
  #allocation1 [shape = 'u32[144,128]{1,0:T(1,128)}', space=vmem, size = 0x12000, scoped, tag = 'internal scratch']
  %s0 = inlined_call_operand.vmem [shape: bf16[16,16], index: 0, kind: input, shape index: {}]
  %s1 = inlined_call_operand.vmem [shape: bf16[16,5], index: 1, kind: input, shape index: {}]
  %s2 = inlined_call_operand.vmem [shape: f32[2,16,128], index: 2, kind: input, shape index: {}]
  %s3 = inlined_call_operand.vmem [shape: bf16[2,16,64], index: 3, kind: input, shape index: {}]
  %s4 = inlined_call_operand.hbm [shape: bf16[2,16,32], index: 4, kind: input, shape index: {}]
  %s5 = inlined_call_operand.vmem [shape: bf16[2,32,16], index: 5, kind: input, shape index: {}]
  %s6 = inlined_call_operand.hbm [shape: bf16[16,16], index: 6, kind: output, shape index: {}]
  %s7 = sld [smem:[#allocation0]]
  $region38: #{tpu_custom_call.1} parent=0
    _
  %s9 = ssub.s32 1, %s7
  %s10 = scalar_select 0, %s9, %s7
  $region1: #{tpu_custom_call.1} parent=0
    #allocation2 [shape = 'u8[8192]{0}', space=vmem, size = 0x2000, scoped, tag = 'input window, operand 4, single buffered']
    #allocation3 [shape = 's32[1]{0}', space=sflag, size = 0x4, scoped, tag = 'scoped memory for tpu_custom_call.1']
    #allocation4 [shape = 's32[1]{0}', space=sflag, size = 0x4, scoped, tag = 'scoped memory for tpu_custom_call.1']
    #allocation5 [shape = 'u8[4096]{0}', space=vmem, size = 0x1000, scoped, tag = 'output window, operand 0, single buffered']
    %11 = vsyncpa [#allocation3], 0
    %12 = vsyncpa [#allocation4], 0
    // Predicated region
    $region2: #{tpu_custom_call.1} parent=1 // pred_check
      _
    $region3: #{tpu_custom_call.1} parent=1 // pred_check_branch
      %14 = sbr.rel (0) target = $region5
    $region4: #{tpu_custom_call.1} parent=1 // pred_region
      _
    $region5: #{tpu_custom_call.1} parent=1 // pred_fallthru
      _
    // Predicated region
    $region6: #{tpu_custom_call.1} parent=1 // pred_check
      _
    $region7: #{tpu_custom_call.1} parent=1 // pred_check_branch
      %16 = sbr.rel (0) target = $region9
    $region8: #{tpu_custom_call.1} parent=1 // pred_region
      _
    $region9: #{tpu_custom_call.1} parent=1 // pred_fallthru
      _
    // Predicated region
    $region10: #{tpu_custom_call.1} parent=1 // pred_check
      _
    $region11: #{tpu_custom_call.1} parent=1 // pred_check_branch
      %18 = sbr.rel (0) target = $region13
    $region12: #{tpu_custom_call.1} parent=1 // pred_region
      _
    $region13: #{tpu_custom_call.1} parent=1 // pred_fallthru
      _
    // Predicated region
    $region14: #{tpu_custom_call.1} parent=1 // pred_check
      _
    $region15: #{tpu_custom_call.1} parent=1 // pred_check_branch
      %20 = sbr.rel (0) target = $region17
    $region16: #{tpu_custom_call.1} parent=1 // pred_region
      _
    $region17: #{tpu_custom_call.1} parent=1 // pred_fallthru
      _
    // Predicated region
    $region18: #{tpu_custom_call.1} parent=1 // pred_check
      _
    $region19: #{tpu_custom_call.1} parent=1 // pred_check_branch
      %22 = sbr.rel (0) target = $region21
    $region20: #{tpu_custom_call.1} parent=1 // pred_region
      %s24 = ssub.s32 256, 256
      %25 = vsyncadd [#allocation3], %s24
      %s26 = sshll.u32 [#allocation2], 4
      %s27 = int_to_ptr.vmem [resolvable:$true] %s26
      %32 = dma.hbm_to_vmem [thread:$0]  %s4, 256, %s27, [#allocation3], 64, 64, 4
    $region21: #{tpu_custom_call.1} parent=1 // pred_fallthru
      _
    // Predicated region
    $region22: #{tpu_custom_call.1} parent=1 // pred_check
      _
    $region23: #{tpu_custom_call.1} parent=1 // pred_check_branch
      %34 = sbr.rel (0) target = $region25
    $region24: #{tpu_custom_call.1} parent=1 // pred_region
      _
    $region25: #{tpu_custom_call.1} parent=1 // pred_fallthru
      _
    // Predicated region
    $region26: #{tpu_custom_call.1} parent=1 // pred_check
      _
    $region27: #{tpu_custom_call.1} parent=1 // pred_check_branch
      %36 = sbr.rel (0) target = $region29
    $region28: #{tpu_custom_call.1} parent=1 // pred_region
      %37 = dma.done [#allocation3], 256
    $region29: #{tpu_custom_call.1} parent=1 // pred_fallthru
      _
    %v39 = vld [vmem:[%s0] sm:$0xf]
    %v40 = vld [vmem:[%s0 + $0x4] sm:$0xf]
    %v41 = vunpack.c.l.bf16 %v39
    %v42 = vunpack.c.l.bf16 %v40
    %v43 = vld [vmem:[%s1] sm:$0xf]
    %v44 = vld [vmem:[%s1 + $0x4] sm:$0xf]
    %v45 = vunpack.c.l.bf16 %v43
    %v46 = vunpack.c.l.bf16 %v44
    %v47 = vld [vmem:[%s2] sm:$0xff]
    %v48 = vld [vmem:[%s2 + $0x8] sm:$0xff]
    %v49 = vld [vmem:[%s3] sm:$0xf]
    %v50 = vld [vmem:[%s3 + $0x4] sm:$0xf]
    %v51 = vld [vmem:[#allocation2] sm:$0xf]
    %v52 = vld [vmem:[#allocation2 + $0x4] sm:$0xf]
    %v53 = vld [vmem:[%s5] sm:$0xf]
    %v54 = vld [vmem:[%s5 + $0x4] sm:$0xf]
    %v55 = vld [vmem:[%s5 + $0x8] sm:$0xf]
    %v56 = vld [vmem:[%s5 + $0xc] sm:$0xf]
    %vm57 = vcmask 130048
    %v58 = vsel %vm57, %v41, 0.0
    %59 = vadd.xlane.f32.xlu0 %v58
    %v60 = vpop.xlane.xlu0 %59
    %v61 = vsel %vm57, %v42, 0.0
    %62 = vadd.xlane.f32.xlu0 %v61
    %v63 = vpop.xlane.xlu0 %62
    %v64 = vrcp.pop 16.0
    %v65 = vmul.f32 %v60, %v64
    %v66 = vmul.f32 %v63, %v64
    %v67 = vsub.f32 %v41, %v65
    %v68 = vsub.f32 %v42, %v66
    %v69 = vmul.f32 %v67, %v67
    %v70 = vmul.f32 %v68, %v68
    %v71 = vsel %vm57, %v69, 0.0
    %72 = vadd.xlane.f32.xlu0 %v71
    %v73 = vpop.xlane.xlu0 %72
    %v74 = vsel %vm57, %v70, 0.0
    %75 = vadd.xlane.f32.xlu0 %v74
    %v76 = vpop.xlane.xlu0 %75
    %v77 = vmul.f32 %v73, %v64
    %v78 = vmul.f32 %v76, %v64
    %v79 = vadd.f32 %v77, 1e-05
    %v80 = vadd.f32 %v78, 1e-05
    %v81 = vrsqrt.pop %v79
    %v82 = vrsqrt.pop %v80
    %v83 = vmul.f32 %v67, %v81
    %v84 = vmul.f32 %v68, %v82
    %v85 = vlaneseq
    %v86 = vshrl.u32 %v85, 7
    %v87 = vsub.s32 0, %v86
    %v88 = vrot.slane %v47, %v87
    %v89 = vmul.f32 %v83, %v88
    %v90 = vmul.f32 %v84, %v88
    %v91 = vlaneseq
    %v92 = vshrl.u32 %v91, 7
    %v93 = vsub.s32 1, %v92
    %v94 = vrot.slane %v47, %v93
    %v95 = vadd.f32 %v89, %v94
    %v96 = vadd.f32 %v90, %v94
    %v97 = vpack.c.bf16 %v96, %v95
    %v98 = vlaneseq
    %v99 = vshrl.u32 %v98, 7
    %v100 = vsub.s32 2, %v99
    %v101 = vrot.slane %v47, %v100
    %v104 = vunpack.c.l.b16 %v49
    %v105 = vunpack.c.l.b16 %v50
    %v106 = vpack.c.b16 %v105, %v104
    %v109 = vsel %vm57, %v97, 0
    %111 = vmatprep.subr.bf16.mxu0 0
    %112 = vmatpush1.bf16.msra.mxu0 %v106
    %113 = vmatprep.subr.bf16.mxu0 0
    %114 = vmatpush1.bf16.msra.mxu0 0
    %115 = vmatprep.subr.bf16.mxu0 0
    %116 = vmatpush1.bf16.msra.mxu0 0
    %117 = vmatprep.subr.bf16.mxu0 0
    %118 = vmatpush1.bf16.msra.mxu0 0
    %119 = vmatprep.subr.bf16.mxu0 0
    %120 = vmatpush1.bf16.msra.mxu0 0
    %121 = vmatprep.subr.bf16.mxu0 0
    %122 = vmatpush1.bf16.msra.mxu0 0
    %123 = vmatprep.subr.bf16.mxu0 0
    %124 = vmatpush1.bf16.msra.mxu0 0
    %125 = vmatprep.subr.bf16.mxu0 0
    %126 = vmatpush1.bf16.msra.mxu0 0
    %127 = vmatprep.subr.bf16.mxu0 0
    %128 = vmatpush1.bf16.msra.mxu0 0
    %129 = vmatprep.subr.bf16.mxu0 0
    %130 = vmatpush1.bf16.msra.mxu0 0
    %131 = vmatprep.subr.bf16.mxu0 0
    %132 = vmatpush1.bf16.msra.mxu0 0
    %133 = vmatprep.subr.bf16.mxu0 0
    %134 = vmatpush1.bf16.msra.mxu0 0
    %135 = vmatprep.subr.bf16.mxu0 0
    %136 = vmatpush1.bf16.msra.mxu0 0
    %137 = vmatprep.subr.bf16.mxu0 0
    %138 = vmatpush1.bf16.msra.mxu0 0
    %139 = vmatprep.subr.bf16.mxu0 0
    %140 = vmatpush1.bf16.msra.mxu0 0
    %141 = vmatprep.subr.bf16.mxu0 0
    %142 = vmatpush1.bf16.msra.mxu0 0
    %143 = vmatprep.mubr.bf16.mxu0 0
    %144 = vmatmul.mubr.bf16.gmra.mrb[0].mxu0 %v109
    %v145 = vpop.f32.mrb[0].mxu0
    %v146 = vadd.f32 %v101, %v145
    %v147 = vpop.f32.mrb[0].mxu0
    %v148 = vpop.f32.mrb[0].mxu0
    %v149 = vadd.f32 %v101, %v148
    %v150 = vpop.f32.mrb[0].mxu0
    %151 = vdwg.mxu0
    %v152 = vadd.f32 %v146, 3.0
    %v153 = vadd.f32 %v149, 3.0
    %v154 = vmax.f32 %v152, 0.0
    %v155 = vmax.f32 %v153, 0.0
    %v156 = vmin.f32 %v154, 6.0
    %v157 = vmin.f32 %v155, 6.0
    %v158 = vmul.f32 %v146, %v156
    %v159 = vmul.f32 %v149, %v157
    %v160 = vmul.f32 %v158, 0.16666667
    %v161 = vmul.f32 %v159, 0.16666667
    %163 = vset.pattern.permute.xlu0 0
    %164 = vperm.xlu0 %163, %v45
    %v165 = vpop.permute.xlu0 %164
    %168 = vset.pattern.permute.xlu0 0
    %169 = vperm.xlu0 %168, %v46
    %v170 = vpop.permute.xlu0 %169
    %v172 = vlaneseq
    %v173 = vshrl.u32 %v172, 7
    %v174 = vsub.s32 6, %v173
    %v175 = vrot.slane %v47, %v174
    %v176 = vmul.f32 %v165, %v175
    %v177 = vmul.f32 %v170, %v175
    %v178 = vlaneseq
    %v179 = vshrl.u32 %v178, 7
    %v180 = vsub.s32 3, %v179
    %v181 = vrot.slane %v47, %v180
    %v182 = vadd.f32 %v181, %v176
    %v183 = vadd.f32 %v181, %v177
    %184 = vset.pattern.permute.xlu0 1
    %185 = vperm.xlu0 %184, %v45
    %v186 = vpop.permute.xlu0 %185
    %188 = vset.pattern.permute.xlu0 1
    %189 = vperm.xlu0 %188, %v46
    %v190 = vpop.permute.xlu0 %189
    %v192 = vlaneseq
    %v193 = vshrl.u32 %v192, 7
    %v194 = vsub.s32 7, %v193
    %v195 = vrot.slane %v47, %v194
    %v196 = vmul.f32 %v186, %v195
    %v197 = vmul.f32 %v190, %v195
    %v198 = vadd.f32 %v182, %v196
    %v199 = vadd.f32 %v183, %v197
    %200 = vset.pattern.permute.xlu0 2
    %201 = vperm.xlu0 %200, %v45
    %v202 = vpop.permute.xlu0 %201
    %204 = vset.pattern.permute.xlu0 2
    %205 = vperm.xlu0 %204, %v46
    %v206 = vpop.permute.xlu0 %205
    %v208 = vlaneseq
    %v209 = vshrl.u32 %v208, 7
    %v210 = vsub.s32 0, %v209
    %v211 = vrot.slane %v48, %v210
    %v212 = vmul.f32 %v202, %v211
    %v213 = vmul.f32 %v206, %v211
    %v214 = vadd.f32 %v198, %v212
    %v215 = vadd.f32 %v199, %v213
    %216 = vset.pattern.permute.xlu0 3
    %217 = vperm.xlu0 %216, %v45
    %v218 = vpop.permute.xlu0 %217
    %220 = vset.pattern.permute.xlu0 3
    %221 = vperm.xlu0 %220, %v46
    %v222 = vpop.permute.xlu0 %221
    %v224 = vlaneseq
    %v225 = vshrl.u32 %v224, 7
    %v226 = vsub.s32 1, %v225
    %v227 = vrot.slane %v48, %v226
    %v228 = vmul.f32 %v218, %v227
    %v229 = vmul.f32 %v222, %v227
    %v230 = vadd.f32 %v214, %v228
    %v231 = vadd.f32 %v215, %v229
    %232 = vset.pattern.permute.xlu0 4
    %233 = vperm.xlu0 %232, %v45
    %v234 = vpop.permute.xlu0 %233
    %236 = vset.pattern.permute.xlu0 4
    %237 = vperm.xlu0 %236, %v46
    %v238 = vpop.permute.xlu0 %237
    %v240 = vlaneseq
    %v241 = vshrl.u32 %v240, 7
    %v242 = vsub.s32 2, %v241
    %v243 = vrot.slane %v48, %v242
    %v244 = vmul.f32 %v234, %v243
    %v245 = vmul.f32 %v238, %v243
    %v246 = vadd.f32 %v230, %v244
    %v247 = vadd.f32 %v231, %v245
    %v248 = vmul.f32 %v246, %v246
    %v249 = vmul.f32 %v247, %v247
    %v250 = vmul.f32 %v246, %v248
    %v251 = vmul.f32 %v247, %v249
    %v252 = vmul.f32 %v250, 0.044715
    %v253 = vmul.f32 %v251, 0.044715
    %v254 = vadd.f32 %v246, %v252
    %v255 = vadd.f32 %v247, %v253
    %v256 = vmul.f32 %v254, 0.7978846
    %v257 = vmul.f32 %v255, 0.7978846
    %v258 = vtanh.pop %v256
    %v259 = vtanh.pop %v257
    %v260 = vadd.f32 %v258, 1.0
    %v261 = vadd.f32 %v259, 1.0
    %v262 = vmul.f32 %v260, 0.5
    %v263 = vmul.f32 %v261, 0.5
    %v264 = vmul.f32 %v246, %v262
    %v265 = vmul.f32 %v247, %v263
    %v266 = vpack.c.bf16 %v265, %v264
    %v267 = vlaneseq
    %v268 = vshrl.u32 %v267, 7
    %v269 = vsub.s32 4, %v268
    %v270 = vrot.slane %v47, %v269
    %v273 = vunpack.c.l.b16 %v51
    %v274 = vunpack.c.l.b16 %v52
    %v275 = vpack.c.b16 %v274, %v273
    %v278 = vsel %vm57, %v266, 0
    %280 = vmatprep.subr.bf16.mxu0 0
    %281 = vmatpush1.bf16.msra.mxu0 %v275
    %282 = vmatprep.subr.bf16.mxu0 0
    %283 = vmatpush1.bf16.msra.mxu0 0
    %284 = vmatprep.subr.bf16.mxu0 0
    %285 = vmatpush1.bf16.msra.mxu0 0
    %286 = vmatprep.subr.bf16.mxu0 0
    %287 = vmatpush1.bf16.msra.mxu0 0
    %288 = vmatprep.subr.bf16.mxu0 0
    %289 = vmatpush1.bf16.msra.mxu0 0
    %290 = vmatprep.subr.bf16.mxu0 0
    %291 = vmatpush1.bf16.msra.mxu0 0
    %292 = vmatprep.subr.bf16.mxu0 0
    %293 = vmatpush1.bf16.msra.mxu0 0
    %294 = vmatprep.subr.bf16.mxu0 0
    %295 = vmatpush1.bf16.msra.mxu0 0
    %296 = vmatprep.subr.bf16.mxu0 0
    %297 = vmatpush1.bf16.msra.mxu0 0
    %298 = vmatprep.subr.bf16.mxu0 0
    %299 = vmatpush1.bf16.msra.mxu0 0
    %300 = vmatprep.subr.bf16.mxu0 0
    %301 = vmatpush1.bf16.msra.mxu0 0
    %302 = vmatprep.subr.bf16.mxu0 0
    %303 = vmatpush1.bf16.msra.mxu0 0
    %304 = vmatprep.subr.bf16.mxu0 0
    %305 = vmatpush1.bf16.msra.mxu0 0
    %306 = vmatprep.subr.bf16.mxu0 0
    %307 = vmatpush1.bf16.msra.mxu0 0
    %308 = vmatprep.subr.bf16.mxu0 0
    %309 = vmatpush1.bf16.msra.mxu0 0
    %310 = vmatprep.subr.bf16.mxu0 0
    %311 = vmatpush1.bf16.msra.mxu0 0
    %312 = vmatprep.mubr.bf16.mxu0 0
    %313 = vmatmul.mubr.bf16.gmra.mrb[0].mxu0 %v278
    %v314 = vpop.f32.mrb[0].mxu0
    %v315 = vadd.f32 %v270, %v314
    %v316 = vpop.f32.mrb[0].mxu0
    %v317 = vpop.f32.mrb[0].mxu0
    %v318 = vadd.f32 %v270, %v317
    %v319 = vpop.f32.mrb[0].mxu0
    %320 = vdwg.mxu0
    %323 = vrot.lane.b32.xlu0 %v315, 32
    %v324 = vpop.permute.xlu0 %323
    %325 = vrot.lane.b32.xlu0 %v318, 32
    %v326 = vpop.permute.xlu0 %325
    %v329 = vadd.f32 %v146, %v324
    %v330 = vadd.f32 %v149, %v326
    %v331 = vxor.u32 %v329, 2147483648
    %v332 = vxor.u32 %v330, 2147483648
    %v333 = vmul.f32 %v331, 1.442695
    %v334 = vpow.pop %v333
    %v335 = vmul.f32 %v332, 1.442695
    %v336 = vpow.pop %v335
    %v337 = vadd.f32 %v334, 1.0
    %v338 = vadd.f32 %v336, 1.0
    %v339 = vrcp.pop %v337
    %v340 = vmul.f32 1.0, %v339
    %v341 = vrcp.pop %v338
    %v342 = vmul.f32 1.0, %v341
    %345 = vrot.lane.b32.xlu0 %v340, 96
    %v346 = vpop.permute.xlu0 %345
    %347 = vrot.lane.b32.xlu0 %v342, 96
    %v348 = vpop.permute.xlu0 %347
    %v351 = vmul.f32 %v160, %v346
    %v352 = vmul.f32 %v161, %v348
    %v353 = vpack.c.bf16 %v352, %v351
    %v354 = vlaneseq
    %v355 = vshrl.u32 %v354, 7
    %v356 = vsub.s32 5, %v355
    %v357 = vrot.slane %v47, %v356
    %v362 = vunpack.c.l.b16 %v53
    %v363 = vunpack.c.l.b16 %v54
    %v364 = vunpack.c.l.b16 %v55
    %v365 = vunpack.c.l.b16 %v56
    %v366 = vpack.c.b16 %v363, %v362
    %v367 = vpack.c.b16 %v365, %v364
    %vm370 = vcmask 261120
    %v372 = vsel %vm370, %v353, 0
    %374 = vmatprep.subr.bf16.mxu0 0
    %375 = vmatpush1.bf16.msra.mxu0 %v366
    %376 = vmatprep.subr.bf16.mxu0 0
    %377 = vmatpush1.bf16.msra.mxu0 %v367
    %378 = vmatprep.subr.bf16.mxu0 0
    %379 = vmatpush1.bf16.msra.mxu0 0
    %380 = vmatprep.subr.bf16.mxu0 0
    %381 = vmatpush1.bf16.msra.mxu0 0
    %382 = vmatprep.subr.bf16.mxu0 0
    %383 = vmatpush1.bf16.msra.mxu0 0
    %384 = vmatprep.subr.bf16.mxu0 0
    %385 = vmatpush1.bf16.msra.mxu0 0
    %386 = vmatprep.subr.bf16.mxu0 0
    %387 = vmatpush1.bf16.msra.mxu0 0
    %388 = vmatprep.subr.bf16.mxu0 0
    %389 = vmatpush1.bf16.msra.mxu0 0
    %390 = vmatprep.subr.bf16.mxu0 0
    %391 = vmatpush1.bf16.msra.mxu0 0
    %392 = vmatprep.subr.bf16.mxu0 0
    %393 = vmatpush1.bf16.msra.mxu0 0
    %394 = vmatprep.subr.bf16.mxu0 0
    %395 = vmatpush1.bf16.msra.mxu0 0
    %396 = vmatprep.subr.bf16.mxu0 0
    %397 = vmatpush1.bf16.msra.mxu0 0
    %398 = vmatprep.subr.bf16.mxu0 0
    %399 = vmatpush1.bf16.msra.mxu0 0
    %400 = vmatprep.subr.bf16.mxu0 0
    %401 = vmatpush1.bf16.msra.mxu0 0
    %402 = vmatprep.subr.bf16.mxu0 0
    %403 = vmatpush1.bf16.msra.mxu0 0
    %404 = vmatprep.subr.bf16.mxu0 0
    %405 = vmatpush1.bf16.msra.mxu0 0
    %406 = vmatprep.mubr.bf16.mxu0 0
    %407 = vmatmul.mubr.bf16.gmra.mrb[0].mxu0 %v372
    %v408 = vpop.f32.mrb[0].mxu0
    %v409 = vadd.f32 %v357, %v408
    %v410 = vpop.f32.mrb[0].mxu0
    %v411 = vpop.f32.mrb[0].mxu0
    %v412 = vadd.f32 %v357, %v411
    %v413 = vpop.f32.mrb[0].mxu0
    %414 = vdwg.mxu0
    %v415 = vadd.f32 %v409, %v41
    %v416 = vadd.f32 %v412, %v42
    %s417 = scalar_lea.vmem %s2, 16
    %v418 = vld [vmem:[%s417] sm:$0xff]
    %v419 = vld [vmem:[%s417 + $0x8] sm:$0xff]
    %s420 = scalar_lea.vmem %s3, 8
    %v421 = vld [vmem:[%s420] sm:$0xf]
    %v422 = vld [vmem:[%s420 + $0x4] sm:$0xf]
    %s423 = scalar_lea.vmem [#allocation2], 8
    %v424 = vld [vmem:[%s423] sm:$0xf]
    %v425 = vld [vmem:[%s423 + $0x4] sm:$0xf]
    %s426 = scalar_lea.vmem %s5, 16
    %v427 = vld [vmem:[%s426] sm:$0xf]
    %v428 = vld [vmem:[%s426 + $0x4] sm:$0xf]
    %v429 = vld [vmem:[%s426 + $0x8] sm:$0xf]
    %v430 = vld [vmem:[%s426 + $0xc] sm:$0xf]
    %v431 = vsel %vm57, %v415, 0.0
    %432 = vadd.xlane.f32.xlu0 %v431
    %v433 = vpop.xlane.xlu0 %432
    %v434 = vsel %vm57, %v416, 0.0
    %435 = vadd.xlane.f32.xlu0 %v434
    %v436 = vpop.xlane.xlu0 %435
    %v437 = vmul.f32 %v433, %v64
    %v438 = vmul.f32 %v436, %v64
    %v439 = vsub.f32 %v415, %v437
    %v440 = vsub.f32 %v416, %v438
    %v441 = vmul.f32 %v439, %v439
    %v442 = vmul.f32 %v440, %v440
    %v443 = vsel %vm57, %v441, 0.0
    %444 = vadd.xlane.f32.xlu0 %v443
    %v445 = vpop.xlane.xlu0 %444
    %v446 = vsel %vm57, %v442, 0.0
    %447 = vadd.xlane.f32.xlu0 %v446
    %v448 = vpop.xlane.xlu0 %447
    %v449 = vmul.f32 %v445, %v64
    %v450 = vmul.f32 %v448, %v64
    %v451 = vadd.f32 %v449, 1e-05
    %v452 = vadd.f32 %v450, 1e-05
    %v453 = vrsqrt.pop %v451
    %v454 = vrsqrt.pop %v452
    %v455 = vmul.f32 %v439, %v453
    %v456 = vmul.f32 %v440, %v454
    %v457 = vlaneseq
    %v458 = vshrl.u32 %v457, 7
    %v459 = vsub.s32 0, %v458
    %v460 = vrot.slane %v418, %v459
    %v461 = vmul.f32 %v455, %v460
    %v462 = vmul.f32 %v456, %v460
    %v463 = vlaneseq
    %v464 = vshrl.u32 %v463, 7
    %v465 = vsub.s32 1, %v464
    %v466 = vrot.slane %v418, %v465
    %v467 = vadd.f32 %v461, %v466
    %v468 = vadd.f32 %v462, %v466
    %v469 = vpack.c.bf16 %v468, %v467
    %v470 = vlaneseq
    %v471 = vshrl.u32 %v470, 7
    %v472 = vsub.s32 2, %v471
    %v473 = vrot.slane %v418, %v472
    %v476 = vunpack.c.l.b16 %v421
    %v477 = vunpack.c.l.b16 %v422
    %v478 = vpack.c.b16 %v477, %v476
    %v481 = vsel %vm57, %v469, 0
    %483 = vmatprep.subr.bf16.mxu0 0
    %484 = vmatpush1.bf16.msra.mxu0 %v478
    %485 = vmatprep.subr.bf16.mxu0 0
    %486 = vmatpush1.bf16.msra.mxu0 0
    %487 = vmatprep.subr.bf16.mxu0 0
    %488 = vmatpush1.bf16.msra.mxu0 0
    %489 = vmatprep.subr.bf16.mxu0 0
    %490 = vmatpush1.bf16.msra.mxu0 0
    %491 = vmatprep.subr.bf16.mxu0 0
    %492 = vmatpush1.bf16.msra.mxu0 0
    %493 = vmatprep.subr.bf16.mxu0 0
    %494 = vmatpush1.bf16.msra.mxu0 0
    %495 = vmatprep.subr.bf16.mxu0 0
    %496 = vmatpush1.bf16.msra.mxu0 0
    %497 = vmatprep.subr.bf16.mxu0 0
    %498 = vmatpush1.bf16.msra.mxu0 0
    %499 = vmatprep.subr.bf16.mxu0 0
    %500 = vmatpush1.bf16.msra.mxu0 0
    %501 = vmatprep.subr.bf16.mxu0 0
    %502 = vmatpush1.bf16.msra.mxu0 0
    %503 = vmatprep.subr.bf16.mxu0 0
    %504 = vmatpush1.bf16.msra.mxu0 0
    %505 = vmatprep.subr.bf16.mxu0 0
    %506 = vmatpush1.bf16.msra.mxu0 0
    %507 = vmatprep.subr.bf16.mxu0 0
    %508 = vmatpush1.bf16.msra.mxu0 0
    %509 = vmatprep.subr.bf16.mxu0 0
    %510 = vmatpush1.bf16.msra.mxu0 0
    %511 = vmatprep.subr.bf16.mxu0 0
    %512 = vmatpush1.bf16.msra.mxu0 0
    %513 = vmatprep.subr.bf16.mxu0 0
    %514 = vmatpush1.bf16.msra.mxu0 0
    %515 = vmatprep.mubr.bf16.mxu0 0
    %516 = vmatmul.mubr.bf16.gmra.mrb[0].mxu0 %v481
    %v517 = vpop.f32.mrb[0].mxu0
    %v518 = vadd.f32 %v473, %v517
    %v519 = vpop.f32.mrb[0].mxu0
    %v520 = vpop.f32.mrb[0].mxu0
    %v521 = vadd.f32 %v473, %v520
    %v522 = vpop.f32.mrb[0].mxu0
    %523 = vdwg.mxu0
    %v524 = vadd.f32 %v518, 3.0
    %v525 = vadd.f32 %v521, 3.0
    %v526 = vmax.f32 %v524, 0.0
    %v527 = vmax.f32 %v525, 0.0
    %v528 = vmin.f32 %v526, 6.0
    %v529 = vmin.f32 %v527, 6.0
    %v530 = vmul.f32 %v518, %v528
    %v531 = vmul.f32 %v521, %v529
    %v532 = vmul.f32 %v530, 0.16666667
    %v533 = vmul.f32 %v531, 0.16666667
    %v534 = vlaneseq
    %v535 = vshrl.u32 %v534, 7
    %v536 = vsub.s32 6, %v535
    %v537 = vrot.slane %v418, %v536
    %v538 = vmul.f32 %v165, %v537
    %v539 = vmul.f32 %v170, %v537
    %v540 = vlaneseq
    %v541 = vshrl.u32 %v540, 7
    %v542 = vsub.s32 3, %v541
    %v543 = vrot.slane %v418, %v542
    %v544 = vadd.f32 %v543, %v538
    %v545 = vadd.f32 %v543, %v539
    %v546 = vlaneseq
    %v547 = vshrl.u32 %v546, 7
    %v548 = vsub.s32 7, %v547
    %v549 = vrot.slane %v418, %v548
    %v550 = vmul.f32 %v186, %v549
    %v551 = vmul.f32 %v190, %v549
    %v552 = vadd.f32 %v544, %v550
    %v553 = vadd.f32 %v545, %v551
    %v554 = vlaneseq
    %v555 = vshrl.u32 %v554, 7
    %v556 = vsub.s32 0, %v555
    %v557 = vrot.slane %v419, %v556
    %v558 = vmul.f32 %v202, %v557
    %v559 = vmul.f32 %v206, %v557
    %v560 = vadd.f32 %v552, %v558
    %v561 = vadd.f32 %v553, %v559
    %v562 = vlaneseq
    %v563 = vshrl.u32 %v562, 7
    %v564 = vsub.s32 1, %v563
    %v565 = vrot.slane %v419, %v564
    %v566 = vmul.f32 %v218, %v565
    %v567 = vmul.f32 %v222, %v565
    %v568 = vadd.f32 %v560, %v566
    %v569 = vadd.f32 %v561, %v567
    %v570 = vlaneseq
    %v571 = vshrl.u32 %v570, 7
    %v572 = vsub.s32 2, %v571
    %v573 = vrot.slane %v419, %v572
    %v574 = vmul.f32 %v234, %v573
    %v575 = vmul.f32 %v238, %v573
    %v576 = vadd.f32 %v568, %v574
    %v577 = vadd.f32 %v569, %v575
    %v578 = vmul.f32 %v576, %v576
    %v579 = vmul.f32 %v577, %v577
    %v580 = vmul.f32 %v576, %v578
    %v581 = vmul.f32 %v577, %v579
    %v582 = vmul.f32 %v580, 0.044715
    %v583 = vmul.f32 %v581, 0.044715
    %v584 = vadd.f32 %v576, %v582
    %v585 = vadd.f32 %v577, %v583
    %v586 = vmul.f32 %v584, 0.7978846
    %v587 = vmul.f32 %v585, 0.7978846
    %v588 = vtanh.pop %v586
    %v589 = vtanh.pop %v587
    %v590 = vadd.f32 %v588, 1.0
    %v591 = vadd.f32 %v589, 1.0
    %v592 = vmul.f32 %v590, 0.5
    %v593 = vmul.f32 %v591, 0.5
    %v594 = vmul.f32 %v576, %v592
    %v595 = vmul.f32 %v577, %v593
    %v596 = vpack.c.bf16 %v595, %v594
    %v597 = vlaneseq
    %v598 = vshrl.u32 %v597, 7
    %v599 = vsub.s32 4, %v598
    %v600 = vrot.slane %v418, %v599
    %v603 = vunpack.c.l.b16 %v424
    %v604 = vunpack.c.l.b16 %v425
    %v605 = vpack.c.b16 %v604, %v603
    %v608 = vsel %vm57, %v596, 0
    %610 = vmatprep.subr.bf16.mxu0 0
    %611 = vmatpush1.bf16.msra.mxu0 %v605
    %612 = vmatprep.subr.bf16.mxu0 0
    %613 = vmatpush1.bf16.msra.mxu0 0
    %614 = vmatprep.subr.bf16.mxu0 0
    %615 = vmatpush1.bf16.msra.mxu0 0
    %616 = vmatprep.subr.bf16.mxu0 0
    %617 = vmatpush1.bf16.msra.mxu0 0
    %618 = vmatprep.subr.bf16.mxu0 0
    %619 = vmatpush1.bf16.msra.mxu0 0
    %620 = vmatprep.subr.bf16.mxu0 0
    %621 = vmatpush1.bf16.msra.mxu0 0
    %622 = vmatprep.subr.bf16.mxu0 0
    %623 = vmatpush1.bf16.msra.mxu0 0
    %624 = vmatprep.subr.bf16.mxu0 0
    %625 = vmatpush1.bf16.msra.mxu0 0
    %626 = vmatprep.subr.bf16.mxu0 0
    %627 = vmatpush1.bf16.msra.mxu0 0
    %628 = vmatprep.subr.bf16.mxu0 0
    %629 = vmatpush1.bf16.msra.mxu0 0
    %630 = vmatprep.subr.bf16.mxu0 0
    %631 = vmatpush1.bf16.msra.mxu0 0
    %632 = vmatprep.subr.bf16.mxu0 0
    %633 = vmatpush1.bf16.msra.mxu0 0
    %634 = vmatprep.subr.bf16.mxu0 0
    %635 = vmatpush1.bf16.msra.mxu0 0
    %636 = vmatprep.subr.bf16.mxu0 0
    %637 = vmatpush1.bf16.msra.mxu0 0
    %638 = vmatprep.subr.bf16.mxu0 0
    %639 = vmatpush1.bf16.msra.mxu0 0
    %640 = vmatprep.subr.bf16.mxu0 0
    %641 = vmatpush1.bf16.msra.mxu0 0
    %642 = vmatprep.mubr.bf16.mxu0 0
    %643 = vmatmul.mubr.bf16.gmra.mrb[0].mxu0 %v608
    %v644 = vpop.f32.mrb[0].mxu0
    %v645 = vadd.f32 %v600, %v644
    %v646 = vpop.f32.mrb[0].mxu0
    %v647 = vpop.f32.mrb[0].mxu0
    %v648 = vadd.f32 %v600, %v647
    %v649 = vpop.f32.mrb[0].mxu0
    %650 = vdwg.mxu0
    %653 = vrot.lane.b32.xlu0 %v645, 32
    %v654 = vpop.permute.xlu0 %653
    %655 = vrot.lane.b32.xlu0 %v648, 32
    %v656 = vpop.permute.xlu0 %655
    %v659 = vadd.f32 %v518, %v654
    %v660 = vadd.f32 %v521, %v656
    %v661 = vxor.u32 %v659, 2147483648
    %v662 = vxor.u32 %v660, 2147483648
    %v663 = vmul.f32 %v661, 1.442695
    %v664 = vpow.pop %v663
    %v665 = vmul.f32 %v662, 1.442695
    %v666 = vpow.pop %v665
    %v667 = vadd.f32 %v664, 1.0
    %v668 = vadd.f32 %v666, 1.0
    %v669 = vrcp.pop %v667
    %v670 = vmul.f32 1.0, %v669
    %v671 = vrcp.pop %v668
    %v672 = vmul.f32 1.0, %v671
    %675 = vrot.lane.b32.xlu0 %v670, 96
    %v676 = vpop.permute.xlu0 %675
    %677 = vrot.lane.b32.xlu0 %v672, 96
    %v678 = vpop.permute.xlu0 %677
    %v681 = vmul.f32 %v532, %v676
    %v682 = vmul.f32 %v533, %v678
    %v683 = vpack.c.bf16 %v682, %v681
    %v684 = vlaneseq
    %v685 = vshrl.u32 %v684, 7
    %v686 = vsub.s32 5, %v685
    %v687 = vrot.slane %v418, %v686
    %v692 = vunpack.c.l.b16 %v427
    %v693 = vunpack.c.l.b16 %v428
    %v694 = vunpack.c.l.b16 %v429
    %v695 = vunpack.c.l.b16 %v430
    %v696 = vpack.c.b16 %v693, %v692
    %v697 = vpack.c.b16 %v695, %v694
    %v701 = vsel %vm370, %v683, 0
    %703 = vmatprep.subr.bf16.mxu0 0
    %704 = vmatpush1.bf16.msra.mxu0 %v696
    %705 = vmatprep.subr.bf16.mxu0 0
    %706 = vmatpush1.bf16.msra.mxu0 %v697
    %707 = vmatprep.subr.bf16.mxu0 0
    %708 = vmatpush1.bf16.msra.mxu0 0
    %709 = vmatprep.subr.bf16.mxu0 0
    %710 = vmatpush1.bf16.msra.mxu0 0
    %711 = vmatprep.subr.bf16.mxu0 0
    %712 = vmatpush1.bf16.msra.mxu0 0
    %713 = vmatprep.subr.bf16.mxu0 0
    %714 = vmatpush1.bf16.msra.mxu0 0
    %715 = vmatprep.subr.bf16.mxu0 0
    %716 = vmatpush1.bf16.msra.mxu0 0
    %717 = vmatprep.subr.bf16.mxu0 0
    %718 = vmatpush1.bf16.msra.mxu0 0
    %719 = vmatprep.subr.bf16.mxu0 0
    %720 = vmatpush1.bf16.msra.mxu0 0
    %721 = vmatprep.subr.bf16.mxu0 0
    %722 = vmatpush1.bf16.msra.mxu0 0
    %723 = vmatprep.subr.bf16.mxu0 0
    %724 = vmatpush1.bf16.msra.mxu0 0
    %725 = vmatprep.subr.bf16.mxu0 0
    %726 = vmatpush1.bf16.msra.mxu0 0
    %727 = vmatprep.subr.bf16.mxu0 0
    %728 = vmatpush1.bf16.msra.mxu0 0
    %729 = vmatprep.subr.bf16.mxu0 0
    %730 = vmatpush1.bf16.msra.mxu0 0
    %731 = vmatprep.subr.bf16.mxu0 0
    %732 = vmatpush1.bf16.msra.mxu0 0
    %733 = vmatprep.subr.bf16.mxu0 0
    %734 = vmatpush1.bf16.msra.mxu0 0
    %735 = vmatprep.mubr.bf16.mxu0 0
    %736 = vmatmul.mubr.bf16.gmra.mrb[0].mxu0 %v701
    %v737 = vpop.f32.mrb[0].mxu0
    %v738 = vadd.f32 %v687, %v737
    %v739 = vpop.f32.mrb[0].mxu0
    %v740 = vpop.f32.mrb[0].mxu0
    %v741 = vadd.f32 %v687, %v740
    %v742 = vpop.f32.mrb[0].mxu0
    %743 = vdwg.mxu0
    %v744 = vadd.f32 %v738, %v415
    %v745 = vadd.f32 %v741, %v416
    %v746 = vpack.c.bf16 %v745, %v744
    %v748 = vunpack.c.l.b16 %v746
    %v749 = vunpack.c.h.b16 %v746
    %v750 = vpack.c.b16 %v748, %v748
    %v751 = vpack.c.b16 %v749, %v749
    %vm754 = vcmask 125952
    %755 = vst.msk [vmem:[#allocation5] sm:$0xf] %vm754, %v750
    %756 = vst.msk [vmem:[#allocation5 + $0x4] sm:$0xf] %vm754, %v751
    // Predicated region
    $region30: #{tpu_custom_call.1} parent=1 // pred_check
      _
    $region31: #{tpu_custom_call.1} parent=1 // pred_check_branch
      %758 = sbr.rel (0) target = $region33
    $region32: #{tpu_custom_call.1} parent=1 // pred_region
      %s760 = ssub.s32 128, 128
      %761 = vsyncadd [#allocation4], %s760
      %s762 = sshll.u32 [#allocation5], 4
      %s763 = int_to_ptr.vmem [resolvable:$true] %s762
      %768 = dma.vmem_to_hbm [thread:$0]  %s763, 128, %s6, [#allocation4], 64, 64, 4
    $region33: #{tpu_custom_call.1} parent=1 // pred_fallthru
      _
    // Predicated region
    $region34: #{tpu_custom_call.1} parent=1 // pred_check
      _
    $region35: #{tpu_custom_call.1} parent=1 // pred_check_branch
      %770 = sbr.rel (0) target = $region37
    $region36: #{tpu_custom_call.1} parent=1 // pred_region
      %771 = dma.done [#allocation4], 128
    $region37: #{tpu_custom_call.1} parent=1 // pred_fallthru
      _
    %772 = vsyncpa [#allocation3], 1
    %773 = vsyncpa [#allocation4], 1

</llo_original>
